<compile_context>
chip_gen: v7x
topology: tpu7x:2x2x1
jax: 0.10.0
libtpu: 0.0.40
codegen_flags: <defaults>
</compile_context>

<pallas_src>
import functools

import jax
import jax.numpy as jnp
from jax.experimental import pallas as pl
from jax.experimental.pallas import tpu as pltpu


def _attn_kernel(*refs, scale: float, use_mask: bool):
    if use_mask:
        q_ref, k_ref, v_ref, mask_ref, o_ref = refs
    else:
        q_ref, k_ref, v_ref, o_ref = refs
        mask_ref = None

    # bf16 operands, f32 accumulation -> full MXU rate on all generations.
    q = q_ref[...].astype(jnp.bfloat16)          # (Bb, Lq, D)
    k = k_ref[...].astype(jnp.bfloat16)          # (Bb, Lk, D)
    v = v_ref[...].astype(jnp.bfloat16)          # (Bb, Lk, D)

    # qk = query @ key^T  -> (Bb, Lq, Lk), contraction over D on the MXU.
    qk = jnp.einsum("bqd,bkd->bqk", q, k, preferred_element_type=jnp.float32)
    scaled = qk * scale                          # .div(inv_scale_factor)

    # nn.Softmax(dim=1) on (B, Lq, Lk) ==> normalize over the QUERY axis.
    m = jnp.max(scaled, axis=1, keepdims=True)
    e = jnp.exp(scaled - m)
    denom = jnp.sum(e, axis=1, keepdims=True)    # (Bb, 1, Lk) -- tiny
    p = e * (1.0 / denom)                        # (Bb, Lq, Lk)

    if use_mask:
        # Pre-scaled keep mask in {0, 1/(1-p)}: dropout is a single VPU mul.
        p = p * mask_ref[...]

    out = jnp.einsum("bqk,bkd->bqd", p.astype(jnp.bfloat16), v,
                     preferred_element_type=jnp.float32)
    o_ref[...] = out.astype(o_ref.dtype)


def _pick_batch_block(batch: int, requested: int) -> int:
    bb = max(1, min(requested, batch))
    while batch % bb != 0:
        bb -= 1
    return bb


def make_dropout_mask(rng_key, shape, dropout_p: float):
    """Torch-style dropout mask: keep w.p. 1-p, survivors scaled by 1/(1-p)."""
    keep = jax.random.bernoulli(rng_key, 1.0 - dropout_p, shape)
    return keep.astype(jnp.float32) * (1.0 / (1.0 - dropout_p))


def sdpa_softmax_dim1(query, key, value, *, inv_scale_factor: float = 0.5,
                      dropout_p: float = 0.2, dropout_mask=None,
                      batch_block: int = 8):
    B, Lq, D = query.shape
    _, Lk, _ = key.shape
    assert key.shape == (B, Lk, D) and value.shape == (B, Lk, D)

    use_mask = dropout_p > 0.0
    if use_mask:
        assert dropout_mask is not None and dropout_mask.shape == (B, Lq, Lk)

    bb = _pick_batch_block(B, batch_block)
    grid = (B // bb,)

    in_specs = [
        pl.BlockSpec((bb, Lq, D), lambda b: (b, 0, 0)),
        pl.BlockSpec((bb, Lk, D), lambda b: (b, 0, 0)),
        pl.BlockSpec((bb, Lk, D), lambda b: (b, 0, 0)),
    ]
    args = [query, key, value]
    if use_mask:
        in_specs.append(pl.BlockSpec((bb, Lq, Lk), lambda b: (b, 0, 0)))
        args.append(dropout_mask.astype(jnp.float32))

    kernel = functools.partial(
        _attn_kernel, scale=1.0 / inv_scale_factor, use_mask=use_mask)

    return pl.pallas_call(
        kernel,
        out_shape=jax.ShapeDtypeStruct((B, Lq, D), query.dtype),
        grid=grid,
        in_specs=in_specs,
        out_specs=pl.BlockSpec((bb, Lq, D), lambda b: (b, 0, 0)),
        compiler_params=pltpu.CompilerParams(
            dimension_semantics=("parallel",)),   # batch axis is independent
    )(*args)


def _reference(query, key, value, inv_scale_factor=0.5, mask=None):
    # Mirrors the kernel's numerics (bf16 operands, f32 accumulation).
    q = query.astype(jnp.bfloat16)
    k = key.astype(jnp.bfloat16)
    v = value.astype(jnp.bfloat16)
    qk = jnp.einsum("bqd,bkd->bqk", q, k,
                    preferred_element_type=jnp.float32) / inv_scale_factor
    p = jax.nn.softmax(qk, axis=1)               # dim=1: over the query axis
    if mask is not None:
        p = p * mask
    out = jnp.einsum("bqk,bkd->bqd", p.astype(jnp.bfloat16), v,
                     preferred_element_type=jnp.float32)
    return out.astype(query.dtype)


if __name__ == "__main__":
    # Small shapes consistent with the module's (B, Lq/Lk, D) convention.
    B, Lq, Lk, D = 2, 16, 32, 128
    k0, k1, k2, k3 = jax.random.split(jax.random.PRNGKey(0), 4)
    query = jax.random.normal(k0, (B, Lq, D), dtype=jnp.float32)
    key_t = jax.random.normal(k1, (B, Lk, D), dtype=jnp.float32)
    value = jax.random.normal(k2, (B, Lk, D), dtype=jnp.float32)

    # Sanity check (dropout disabled) against a numerics-matched reference.
    out_nodrop = sdpa_softmax_dim1(query, key_t, value,
                                   inv_scale_factor=0.5, dropout_p=0.0)
    ref_nodrop = _reference(query, key_t, value, inv_scale_factor=0.5)
    assert jnp.allclose(out_nodrop, ref_nodrop, atol=2e-2, rtol=2e-2)

    # Full forward as in the PyTorch module (training-mode dropout p=0.2,
    # deterministic seeded mask).
    mask = make_dropout_mask(k3, (B, Lq, Lk), dropout_p=0.2)
    out = sdpa_softmax_dim1(query, key_t, value, inv_scale_factor=0.5,
                            dropout_p=0.2, dropout_mask=mask)
    ref = _reference(query, key_t, value, inv_scale_factor=0.5, mask=mask)
    assert jnp.allclose(out, ref, atol=2e-2, rtol=2e-2)

    jax.block_until_ready(out)
    print("KERNEL_OK")
</pallas_src>

<mosaic_0001>
module attributes {stable_mosaic.version = 11 : i64} {
  func.func @_attn_kernel(%arg0: i32, %arg1: memref<2x16x128xf32, #tpu.memory_space<vmem>>, %arg2: memref<2x32x128xf32, #tpu.memory_space<vmem>>, %arg3: memref<2x32x128xf32, #tpu.memory_space<vmem>>, %arg4: memref<2x16x128xf32, #tpu.memory_space<vmem>>) attributes {dimension_semantics = [#tpu.dimension_semantics<parallel>], iteration_bounds = array<i64: 1>, scalar_prefetch = 0 : i64, scratch_operands = 0 : i64, tpu.core_type = #tpu.core_type<tc>, window_params = [{transform_indices = @transform_0, window_bounds = array<i64: 2, 16, 128>}, {transform_indices = @transform_1, window_bounds = array<i64: 2, 32, 128>}, {transform_indices = @transform_2, window_bounds = array<i64: 2, 32, 128>}, {transform_indices = @transform_3, window_bounds = array<i64: 2, 16, 128>}]} {
    %c0 = arith.constant 0 : index
    %c0_0 = arith.constant 0 : index
    %c0_1 = arith.constant 0 : index
    %0 = vector.load %arg1[%c0, %c0_0, %c0_1] : memref<2x16x128xf32, #tpu.memory_space<vmem>>, vector<2x16x128xf32>
    %1 = arith.truncf %0 : vector<2x16x128xf32> to vector<2x16x128xbf16>
    %c0_2 = arith.constant 0 : index
    %c0_3 = arith.constant 0 : index
    %c0_4 = arith.constant 0 : index
    %2 = vector.load %arg2[%c0_2, %c0_3, %c0_4] : memref<2x32x128xf32, #tpu.memory_space<vmem>>, vector<2x32x128xf32>
    %3 = arith.truncf %2 : vector<2x32x128xf32> to vector<2x32x128xbf16>
    %c0_5 = arith.constant 0 : index
    %c0_6 = arith.constant 0 : index
    %c0_7 = arith.constant 0 : index
    %4 = vector.load %arg3[%c0_5, %c0_6, %c0_7] : memref<2x32x128xf32, #tpu.memory_space<vmem>>, vector<2x32x128xf32>
    %5 = arith.truncf %4 : vector<2x32x128xf32> to vector<2x32x128xbf16>
    "tpu.trace_start"() <{level = 10 : i32, message = "bqd,bkd->bqk"}> : () -> ()
    %cst = arith.constant dense<0.000000e+00> : vector<2x16x32xf32>
    %6 = tpu.matmul %1, %3, %cst {dimension_numbers = #tpu.dot_dimension_numbers<[2], [2], [1], [1], [0, 0, 0, 1, 1, 1], [0], [0]>} : vector<2x16x128xbf16>, vector<2x32x128xbf16>, vector<2x16x32xf32> -> vector<2x16x32xf32>
    "tpu.trace_stop"() : () -> ()
    %cst_8 = arith.constant 2.000000e+00 : f32
    %7 = vector.broadcast %cst_8 : f32 to vector<2x16x32xf32>
    %8 = arith.mulf %6, %7 : vector<2x16x32xf32>
    %cst_9 = arith.constant dense<0xFF800000> : vector<2x32xf32>
    %9 = vector.multi_reduction <maximumf>, %8, %cst_9 [1] : vector<2x16x32xf32> to vector<2x32xf32>
    %10 = vector.shape_cast %9 : vector<2x32xf32> to vector<2x1x32xf32>
    %11 = vector.broadcast %10 : vector<2x1x32xf32> to vector<2x16x32xf32>
    %12 = arith.subf %8, %11 : vector<2x16x32xf32>
    %13 = math.exp %12 : vector<2x16x32xf32>
    %cst_10 = arith.constant dense<0.000000e+00> : vector<2x32xf32>
    %14 = vector.multi_reduction <add>, %13, %cst_10 [1] : vector<2x16x32xf32> to vector<2x32xf32>
    %15 = vector.shape_cast %14 : vector<2x32xf32> to vector<2x1x32xf32>
    %cst_11 = arith.constant 1.000000e+00 : f32
    %16 = vector.broadcast %cst_11 : f32 to vector<2x1x32xf32>
    %17 = arith.divf %16, %15 : vector<2x1x32xf32>
    %18 = vector.broadcast %17 : vector<2x1x32xf32> to vector<2x16x32xf32>
    %19 = arith.mulf %13, %18 : vector<2x16x32xf32>
    %20 = arith.truncf %19 : vector<2x16x32xf32> to vector<2x16x32xbf16>
    "tpu.trace_start"() <{level = 10 : i32, message = "bqk,bkd->bqd"}> : () -> ()
    %cst_12 = arith.constant dense<0.000000e+00> : vector<2x16x128xf32>
    %21 = tpu.matmul %20, %5, %cst_12 {dimension_numbers = #tpu.dot_dimension_numbers<[2], [1], [1], [2], [0, 0, 0, 1, 1, 2], [0], [0]>} : vector<2x16x32xbf16>, vector<2x32x128xbf16>, vector<2x16x128xf32> -> vector<2x16x128xf32>
    "tpu.trace_stop"() : () -> ()
    %c0_13 = arith.constant 0 : index
    %c0_14 = arith.constant 0 : index
    %c0_15 = arith.constant 0 : index
    %22 = vector.load %arg4[%c0_13, %c0_14, %c0_15] : memref<2x16x128xf32, #tpu.memory_space<vmem>>, vector<2x16x128xf32>
    tpu.vector_store %arg4[%c0_13, %c0_14, %c0_15], %21 {strides = array<i32>} : memref<2x16x128xf32, #tpu.memory_space<vmem>>, vector<2x16x128xf32>,
    return
  }
  func.func @transform_0(%arg0: i32) -> (i32, i32, i32) {
    %c0_i32 = arith.constant 0 : i32
    %c0_i32_0 = arith.constant 0 : i32
    %c0_i32_1 = arith.constant 0 : i32
    return %arg0, %c0_i32, %c0_i32_0 : i32, i32, i32
  }
  func.func @transform_1(%arg0: i32) -> (i32, i32, i32) {
    %c0_i32 = arith.constant 0 : i32
    %c0_i32_0 = arith.constant 0 : i32
    %c0_i32_1 = arith.constant 0 : i32
    return %arg0, %c0_i32, %c0_i32_0 : i32, i32, i32
  }
  func.func @transform_2(%arg0: i32) -> (i32, i32, i32) {
    %c0_i32 = arith.constant 0 : i32
    %c0_i32_0 = arith.constant 0 : i32
    %c0_i32_1 = arith.constant 0 : i32
    return %arg0, %c0_i32, %c0_i32_0 : i32, i32, i32
  }
  func.func @transform_3(%arg0: i32) -> (i32, i32, i32) {
    %c0_i32 = arith.constant 0 : i32
    %c0_i32_0 = arith.constant 0 : i32
    %c0_i32_1 = arith.constant 0 : i32
    return %arg0, %c0_i32, %c0_i32_0 : i32, i32, i32
  }
}

</mosaic_0001>

<llo_original>
// kernel: tpu_custom_call.1
$region0: #{tpu_custom_call.1}
  #allocation0 [shape = 'u32[]', space=smem, size = 0x4, offset = 0x4, fixed_abs, tag = 'smem constant byte address 0x4 - core index']
  #allocation1 [shape = 'u32[144,128]{1,0:T(1,128)}', space=vmem, size = 0x12000, scoped, tag = 'internal scratch']
  %s0 = inlined_call_operand.hbm [shape: f32[2,16,128], index: 0, kind: input, shape index: {}]
  %s1 = inlined_call_operand.hbm [shape: f32[2,32,128], index: 1, kind: input, shape index: {}]
  %s2 = inlined_call_operand.hbm [shape: f32[2,32,128], index: 2, kind: input, shape index: {}]
  %s3 = inlined_call_operand.hbm [shape: f32[2,16,128], index: 3, kind: output, shape index: {}]
  %s4 = sld [smem:[#allocation0]]
  $region34: #{tpu_custom_call.1} parent=0
    _
  %s6 = ssub.s32 1, %s4
  %s7 = scalar_select 0, %s6, %s4
  $region1: #{tpu_custom_call.1} parent=0
    #allocation2 [shape = 'u8[16384]{0}', space=vmem, size = 0x4000, scoped, tag = 'input window, operand 0, single buffered']
    #allocation3 [shape = 's32[1]{0}', space=sflag, size = 0x4, scoped, tag = 'scoped memory for tpu_custom_call.1']
    #allocation4 [shape = 's32[1]{0}', space=sflag, size = 0x4, scoped, tag = 'scoped memory for tpu_custom_call.1']
    #allocation5 [shape = 'u8[32768]{0}', space=vmem, size = 0x8000, scoped, tag = 'input window, operand 1, single buffered']
    #allocation6 [shape = 's32[1]{0}', space=sflag, size = 0x4, scoped, tag = 'scoped memory for tpu_custom_call.1']
    #allocation7 [shape = 'u8[32768]{0}', space=vmem, size = 0x8000, scoped, tag = 'input window, operand 2, single buffered']
    #allocation8 [shape = 'u8[16384]{0}', space=vmem, size = 0x4000, scoped, tag = 'output window, operand 0, single buffered']
    %8 = vsyncpa [#allocation3], 0
    %9 = vsyncpa [#allocation6], 0
    %10 = vsyncpa [#allocation4], 0
    // Predicated region
    $region2: #{tpu_custom_call.1} parent=1 // pred_check
      _
    $region3: #{tpu_custom_call.1} parent=1 // pred_check_branch
      %12 = sbr.rel (0) target = $region5
    $region4: #{tpu_custom_call.1} parent=1 // pred_region
      %s14 = ssub.s32 512, 512
      %15 = vsyncadd [#allocation3], %s14
      %s16 = sshll.u32 [#allocation2], 4
      %s17 = int_to_ptr.vmem [resolvable:$true] %s16
      %22 = dma.hbm_to_vmem [thread:$0]  %s0, 512, %s17, [#allocation3], 128, 128, 8
    $region5: #{tpu_custom_call.1} parent=1 // pred_fallthru
      _
    // Predicated region
    $region6: #{tpu_custom_call.1} parent=1 // pred_check
      _
    $region7: #{tpu_custom_call.1} parent=1 // pred_check_branch
      %24 = sbr.rel (0) target = $region9
    $region8: #{tpu_custom_call.1} parent=1 // pred_region
      %s26 = ssub.s32 1024, 1024
      %27 = vsyncadd [#allocation6], %s26
      %s28 = sshll.u32 [#allocation5], 4
      %s29 = int_to_ptr.vmem [resolvable:$true] %s28
      %34 = dma.hbm_to_vmem [thread:$0]  %s1, 1024, %s29, [#allocation6], 128, 128, 8
    $region9: #{tpu_custom_call.1} parent=1 // pred_fallthru
      _
    // Predicated region
    $region10: #{tpu_custom_call.1} parent=1 // pred_check
      _
    $region11: #{tpu_custom_call.1} parent=1 // pred_check_branch
      %36 = sbr.rel (0) target = $region13
    $region12: #{tpu_custom_call.1} parent=1 // pred_region
      %s38 = ssub.s32 1024, 1024
      %39 = vsyncadd [#allocation6], %s38
      %s40 = sshll.u32 [#allocation7], 4
      %s41 = int_to_ptr.vmem [resolvable:$true] %s40
      %46 = dma.hbm_to_vmem [thread:$0]  %s2, 1024, %s41, [#allocation6], 128, 128, 8
    $region13: #{tpu_custom_call.1} parent=1 // pred_fallthru
      _
    // Predicated region
    $region14: #{tpu_custom_call.1} parent=1 // pred_check
      _
    $region15: #{tpu_custom_call.1} parent=1 // pred_check_branch
      %48 = sbr.rel (0) target = $region17
    $region16: #{tpu_custom_call.1} parent=1 // pred_region
      %49 = dma.done [#allocation3], 512
    $region17: #{tpu_custom_call.1} parent=1 // pred_fallthru
      _
    // Predicated region
    $region18: #{tpu_custom_call.1} parent=1 // pred_check
      _
    $region19: #{tpu_custom_call.1} parent=1 // pred_check_branch
      %51 = sbr.rel (0) target = $region21
    $region20: #{tpu_custom_call.1} parent=1 // pred_region
      %52 = dma.done [#allocation6], 1024
    $region21: #{tpu_custom_call.1} parent=1 // pred_fallthru
      _
    // Predicated region
    $region22: #{tpu_custom_call.1} parent=1 // pred_check
      _
    $region23: #{tpu_custom_call.1} parent=1 // pred_check_branch
      %54 = sbr.rel (0) target = $region25
    $region24: #{tpu_custom_call.1} parent=1 // pred_region
      %55 = dma.done [#allocation6], 1024
    $region25: #{tpu_custom_call.1} parent=1 // pred_fallthru
      _
    %v57 = vld [vmem:[#allocation2] sm:$0xff]
    %v58 = vld [vmem:[#allocation2 + $0x8] sm:$0xff]
    %v59 = vld [vmem:[#allocation2 + $0x10] sm:$0xff]
    %v60 = vld [vmem:[#allocation2 + $0x18] sm:$0xff]
    %v61 = vpack.c.bf16 %v58, %v57
    %v62 = vpack.c.bf16 %v60, %v59
    %v63 = vld [vmem:[#allocation5] sm:$0xff]
    %v64 = vld [vmem:[#allocation5 + $0x8] sm:$0xff]
    %v65 = vld [vmem:[#allocation5 + $0x10] sm:$0xff]
    %v66 = vld [vmem:[#allocation5 + $0x18] sm:$0xff]
    %v67 = vld [vmem:[#allocation5 + $0x20] sm:$0xff]
    %v68 = vld [vmem:[#allocation5 + $0x28] sm:$0xff]
    %v69 = vld [vmem:[#allocation5 + $0x30] sm:$0xff]
    %v70 = vld [vmem:[#allocation5 + $0x38] sm:$0xff]
    %v71 = vpack.c.bf16 %v64, %v63
    %v72 = vpack.c.bf16 %v66, %v65
    %v73 = vpack.c.bf16 %v68, %v67
    %v74 = vpack.c.bf16 %v70, %v69
    %v75 = vld [vmem:[#allocation7] sm:$0xff]
    %v76 = vld [vmem:[#allocation7 + $0x8] sm:$0xff]
    %v77 = vld [vmem:[#allocation7 + $0x10] sm:$0xff]
    %v78 = vld [vmem:[#allocation7 + $0x18] sm:$0xff]
    %v79 = vld [vmem:[#allocation7 + $0x20] sm:$0xff]
    %v80 = vld [vmem:[#allocation7 + $0x28] sm:$0xff]
    %v81 = vld [vmem:[#allocation7 + $0x30] sm:$0xff]
    %v82 = vld [vmem:[#allocation7 + $0x38] sm:$0xff]
    %v83 = vpack.c.bf16 %v76, %v75
    %v84 = vpack.c.bf16 %v78, %v77
    %v85 = vpack.c.bf16 %v80, %v79
    %v86 = vpack.c.bf16 %v82, %v81
    %87 = vmatprep.subr.bf16.mxu0 0
    %88 = vmatpush1.bf16.xpose.msra.mxu0 %v71
    %89 = vmatprep.subr.bf16.mxu0 0
    %90 = vmatpush1.bf16.xpose.msra.mxu0 %v72
    %91 = vmatprep.subr.bf16.mxu0 0
    %92 = vmatpush1.bf16.xpose.msra.mxu0 0
    %93 = vmatprep.subr.bf16.mxu0 0
    %94 = vmatpush1.bf16.xpose.msra.mxu0 0
    %95 = vmatprep.subr.bf16.mxu0 0
    %96 = vmatpush1.bf16.xpose.msra.mxu0 0
    %97 = vmatprep.subr.bf16.mxu0 0
    %98 = vmatpush1.bf16.xpose.msra.mxu0 0
    %99 = vmatprep.subr.bf16.mxu0 0
    %100 = vmatpush1.bf16.xpose.msra.mxu0 0
    %101 = vmatprep.subr.bf16.mxu0 0
    %102 = vmatpush1.bf16.xpose.msra.mxu0 0
    %103 = vmatprep.subr.bf16.mxu0 0
    %104 = vmatpush1.bf16.xpose.msra.mxu0 0
    %105 = vmatprep.subr.bf16.mxu0 0
    %106 = vmatpush1.bf16.xpose.msra.mxu0 0
    %107 = vmatprep.subr.bf16.mxu0 0
    %108 = vmatpush1.bf16.xpose.msra.mxu0 0
    %109 = vmatprep.subr.bf16.mxu0 0
    %110 = vmatpush1.bf16.xpose.msra.mxu0 0
    %111 = vmatprep.subr.bf16.mxu0 0
    %112 = vmatpush1.bf16.xpose.msra.mxu0 0
    %113 = vmatprep.subr.bf16.mxu0 0
    %114 = vmatpush1.bf16.xpose.msra.mxu0 0
    %115 = vmatprep.subr.bf16.mxu0 0
    %116 = vmatpush1.bf16.xpose.msra.mxu0 0
    %117 = vmatprep.subr.bf16.mxu0 0
    %118 = vmatpush1.bf16.xpose.msra.mxu0 0
    %119 = vmatprep.mubr.bf16.mxu0 0
    %120 = vmatmul.mubr.bf16.gmra.mrb[0].mxu0 %v61
    %v121 = vpop.f32.mrb[0].mxu0
    %v122 = vadd.f32 0.0, %v121
    %v123 = vpop.f32.mrb[0].mxu0
    %v124 = vpop.f32.mrb[0].mxu0
    %v125 = vadd.f32 0.0, %v124
    %v126 = vpop.f32.mrb[0].mxu0
    %127 = vdwg.mxu0
    %128 = vmatprep.subr.bf16.mxu0 0
    %129 = vmatpush1.bf16.xpose.msra.mxu0 %v73
    %130 = vmatprep.subr.bf16.mxu0 0
    %131 = vmatpush1.bf16.xpose.msra.mxu0 %v74
    %132 = vmatprep.subr.bf16.mxu0 0
    %133 = vmatpush1.bf16.xpose.msra.mxu0 0
    %134 = vmatprep.subr.bf16.mxu0 0
    %135 = vmatpush1.bf16.xpose.msra.mxu0 0
    %136 = vmatprep.subr.bf16.mxu0 0
    %137 = vmatpush1.bf16.xpose.msra.mxu0 0
    %138 = vmatprep.subr.bf16.mxu0 0
    %139 = vmatpush1.bf16.xpose.msra.mxu0 0
    %140 = vmatprep.subr.bf16.mxu0 0
    %141 = vmatpush1.bf16.xpose.msra.mxu0 0
    %142 = vmatprep.subr.bf16.mxu0 0
    %143 = vmatpush1.bf16.xpose.msra.mxu0 0
    %144 = vmatprep.subr.bf16.mxu0 0
    %145 = vmatpush1.bf16.xpose.msra.mxu0 0
    %146 = vmatprep.subr.bf16.mxu0 0
    %147 = vmatpush1.bf16.xpose.msra.mxu0 0
    %148 = vmatprep.subr.bf16.mxu0 0
    %149 = vmatpush1.bf16.xpose.msra.mxu0 0
    %150 = vmatprep.subr.bf16.mxu0 0
    %151 = vmatpush1.bf16.xpose.msra.mxu0 0
    %152 = vmatprep.subr.bf16.mxu0 0
    %153 = vmatpush1.bf16.xpose.msra.mxu0 0
    %154 = vmatprep.subr.bf16.mxu0 0
    %155 = vmatpush1.bf16.xpose.msra.mxu0 0
    %156 = vmatprep.subr.bf16.mxu0 0
    %157 = vmatpush1.bf16.xpose.msra.mxu0 0
    %158 = vmatprep.subr.bf16.mxu0 0
    %159 = vmatpush1.bf16.xpose.msra.mxu0 0
    %160 = vmatprep.mubr.bf16.mxu0 0
    %161 = vmatmul.mubr.bf16.gmra.mrb[0].mxu0 %v62
    %v162 = vpop.f32.mrb[0].mxu0
    %v163 = vadd.f32 0.0, %v162
    %v164 = vpop.f32.mrb[0].mxu0
    %v165 = vpop.f32.mrb[0].mxu0
    %v166 = vadd.f32 0.0, %v165
    %v167 = vpop.f32.mrb[0].mxu0
    %168 = vdwg.mxu0
    %v169 = vmul.f32 %v122, 2.0
    %v170 = vmul.f32 %v125, 2.0
    %v171 = vmul.f32 %v163, 2.0
    %v172 = vmul.f32 %v166, 2.0
    %vm173 = vcmask 261120
    %v174 = vsel %vm173, %v169, -inf
    %v175 = vsel %vm173, %v170, -inf
    %v176 = vmax.f32 %v174, %v175
    %v177 = vrot.slane %v176, 4
    %v178 = vmax.f32 %v176, %v177
    %v179 = vrot.slane %v178, 2
    %v180 = vmax.f32 %v178, %v179
    %v181 = vrot.slane %v180, 1
    %v182 = vmax.f32 %v180, %v181
    %v183 = vsel %vm173, %v171, -inf
    %v184 = vsel %vm173, %v172, -inf
    %v185 = vmax.f32 %v183, %v184
    %v186 = vrot.slane %v185, 4
    %v187 = vmax.f32 %v185, %v186
    %v188 = vrot.slane %v187, 2
    %v189 = vmax.f32 %v187, %v188
    %v190 = vrot.slane %v189, 1
    %v191 = vmax.f32 %v189, %v190
    %v192 = vsub.f32 %v169, %v182
    %v193 = vsub.f32 %v170, %v182
    %v194 = vsub.f32 %v171, %v191
    %v195 = vsub.f32 %v172, %v191
    %v196 = vmul.f32 %v192, 1.442695
    %v197 = vpow.pop %v196
    %v198 = vmul.f32 %v193, 1.442695
    %v199 = vpow.pop %v198
    %v200 = vmul.f32 %v194, 1.442695
    %v201 = vpow.pop %v200
    %v202 = vmul.f32 %v195, 1.442695
    %v203 = vpow.pop %v202
    %v204 = vsel %vm173, %v197, 0.0
    %v205 = vsel %vm173, %v199, 0.0
    %v206 = vadd.f32 %v204, %v205
    %v207 = vrot.slane %v206, 4
    %v208 = vadd.f32 %v206, %v207
    %v209 = vrot.slane %v208, 2
    %v210 = vadd.f32 %v208, %v209
    %v211 = vrot.slane %v210, 1
    %v212 = vadd.f32 %v210, %v211
    %v213 = vsel %vm173, %v201, 0.0
    %v214 = vsel %vm173, %v203, 0.0
    %v215 = vadd.f32 %v213, %v214
    %v216 = vrot.slane %v215, 4
    %v217 = vadd.f32 %v215, %v216
    %v218 = vrot.slane %v217, 2
    %v219 = vadd.f32 %v217, %v218
    %v220 = vrot.slane %v219, 1
    %v221 = vadd.f32 %v219, %v220
    %v222 = vrcp.pop %v212
    %v223 = vmul.f32 1.0, %v222
    %v224 = vrcp.pop %v221
    %v225 = vmul.f32 1.0, %v224
    %v226 = vmul.f32 %v197, %v223
    %v227 = vmul.f32 %v199, %v223
    %v228 = vmul.f32 %v201, %v225
    %v229 = vmul.f32 %v203, %v225
    %v230 = vpack.c.bf16 %v227, %v226
    %v231 = vpack.c.bf16 %v229, %v228
    %v233 = vsel %vm173, %v230, 0
    %235 = vmatprep.subr.bf16.mxu0 0
    %236 = vmatpush1.bf16.msra.mxu0 %v83
    %237 = vmatprep.subr.bf16.mxu0 0
    %238 = vmatpush1.bf16.msra.mxu0 %v84
    %239 = vmatprep.subr.bf16.mxu0 0
    %240 = vmatpush1.bf16.msra.mxu0 0
    %241 = vmatprep.subr.bf16.mxu0 0
    %242 = vmatpush1.bf16.msra.mxu0 0
    %243 = vmatprep.subr.bf16.mxu0 0
    %244 = vmatpush1.bf16.msra.mxu0 0
    %245 = vmatprep.subr.bf16.mxu0 0
    %246 = vmatpush1.bf16.msra.mxu0 0
    %247 = vmatprep.subr.bf16.mxu0 0
    %248 = vmatpush1.bf16.msra.mxu0 0
    %249 = vmatprep.subr.bf16.mxu0 0
    %250 = vmatpush1.bf16.msra.mxu0 0
    %251 = vmatprep.subr.bf16.mxu0 0
    %252 = vmatpush1.bf16.msra.mxu0 0
    %253 = vmatprep.subr.bf16.mxu0 0
    %254 = vmatpush1.bf16.msra.mxu0 0
    %255 = vmatprep.subr.bf16.mxu0 0
    %256 = vmatpush1.bf16.msra.mxu0 0
    %257 = vmatprep.subr.bf16.mxu0 0
    %258 = vmatpush1.bf16.msra.mxu0 0
    %259 = vmatprep.subr.bf16.mxu0 0
    %260 = vmatpush1.bf16.msra.mxu0 0
    %261 = vmatprep.subr.bf16.mxu0 0
    %262 = vmatpush1.bf16.msra.mxu0 0
    %263 = vmatprep.subr.bf16.mxu0 0
    %264 = vmatpush1.bf16.msra.mxu0 0
    %265 = vmatprep.subr.bf16.mxu0 0
    %266 = vmatpush1.bf16.msra.mxu0 0
    %267 = vmatprep.mubr.bf16.mxu0 0
    %268 = vmatmul.mubr.bf16.gmra.mrb[0].mxu0 %v233
    %v269 = vpop.f32.mrb[0].mxu0
    %v270 = vadd.f32 0.0, %v269
    %v271 = vpop.f32.mrb[0].mxu0
    %v272 = vpop.f32.mrb[0].mxu0
    %v273 = vadd.f32 0.0, %v272
    %v274 = vpop.f32.mrb[0].mxu0
    %275 = vdwg.mxu0
    %v277 = vsel %vm173, %v231, 0
    %279 = vmatprep.subr.bf16.mxu0 0
    %280 = vmatpush1.bf16.msra.mxu0 %v85
    %281 = vmatprep.subr.bf16.mxu0 0
    %282 = vmatpush1.bf16.msra.mxu0 %v86
    %283 = vmatprep.subr.bf16.mxu0 0
    %284 = vmatpush1.bf16.msra.mxu0 0
    %285 = vmatprep.subr.bf16.mxu0 0
    %286 = vmatpush1.bf16.msra.mxu0 0
    %287 = vmatprep.subr.bf16.mxu0 0
    %288 = vmatpush1.bf16.msra.mxu0 0
    %289 = vmatprep.subr.bf16.mxu0 0
    %290 = vmatpush1.bf16.msra.mxu0 0
    %291 = vmatprep.subr.bf16.mxu0 0
    %292 = vmatpush1.bf16.msra.mxu0 0
    %293 = vmatprep.subr.bf16.mxu0 0
    %294 = vmatpush1.bf16.msra.mxu0 0
    %295 = vmatprep.subr.bf16.mxu0 0
    %296 = vmatpush1.bf16.msra.mxu0 0
    %297 = vmatprep.subr.bf16.mxu0 0
    %298 = vmatpush1.bf16.msra.mxu0 0
    %299 = vmatprep.subr.bf16.mxu0 0
    %300 = vmatpush1.bf16.msra.mxu0 0
    %301 = vmatprep.subr.bf16.mxu0 0
    %302 = vmatpush1.bf16.msra.mxu0 0
    %303 = vmatprep.subr.bf16.mxu0 0
    %304 = vmatpush1.bf16.msra.mxu0 0
    %305 = vmatprep.subr.bf16.mxu0 0
    %306 = vmatpush1.bf16.msra.mxu0 0
    %307 = vmatprep.subr.bf16.mxu0 0
    %308 = vmatpush1.bf16.msra.mxu0 0
    %309 = vmatprep.subr.bf16.mxu0 0
    %310 = vmatpush1.bf16.msra.mxu0 0
    %311 = vmatprep.mubr.bf16.mxu0 0
    %312 = vmatmul.mubr.bf16.gmra.mrb[0].mxu0 %v277
    %v313 = vpop.f32.mrb[0].mxu0
    %v314 = vadd.f32 0.0, %v313
    %v315 = vpop.f32.mrb[0].mxu0
    %v316 = vpop.f32.mrb[0].mxu0
    %v317 = vadd.f32 0.0, %v316
    %v318 = vpop.f32.mrb[0].mxu0
    %319 = vdwg.mxu0
    %320 = vst [vmem:[#allocation8] sm:$0xff] %v270
    %321 = vst [vmem:[#allocation8 + $0x8] sm:$0xff] %v273
    %322 = vst [vmem:[#allocation8 + $0x10] sm:$0xff] %v314
    %323 = vst [vmem:[#allocation8 + $0x18] sm:$0xff] %v317
    // Predicated region
    $region26: #{tpu_custom_call.1} parent=1 // pred_check
      _
    $region27: #{tpu_custom_call.1} parent=1 // pred_check_branch
      %325 = sbr.rel (0) target = $region29
    $region28: #{tpu_custom_call.1} parent=1 // pred_region
      %s327 = ssub.s32 512, 512
      %328 = vsyncadd [#allocation4], %s327
      %s329 = sshll.u32 [#allocation8], 4
      %s330 = int_to_ptr.vmem [resolvable:$true] %s329
      %335 = dma.vmem_to_hbm [thread:$0]  %s330, 512, %s3, [#allocation4], 128, 128, 8
    $region29: #{tpu_custom_call.1} parent=1 // pred_fallthru
      _
    // Predicated region
    $region30: #{tpu_custom_call.1} parent=1 // pred_check
      _
    $region31: #{tpu_custom_call.1} parent=1 // pred_check_branch
      %337 = sbr.rel (0) target = $region33
    $region32: #{tpu_custom_call.1} parent=1 // pred_region
      %338 = dma.done [#allocation4], 512
    $region33: #{tpu_custom_call.1} parent=1 // pred_fallthru
      _
    %339 = vsyncpa [#allocation3], 1
    %340 = vsyncpa [#allocation6], 1
    %341 = vsyncpa [#allocation4], 1

</llo_original>
